<compile_context>
chip_gen: v5e
topology: v5e:2x2
jax: 0.10.0
libtpu: 0.0.40
codegen_flags: <defaults>
</compile_context>

<pallas_src>
import functools

import jax
import jax.numpy as jnp
from jax.experimental import pallas as pl
from jax.experimental.pallas import tpu as pltpu


def ensemble_kernel(x_ref, w_ref, b_ref, o_ref):
    # One MXU push per tile: (tm, D_in) @ (D_in, tn) with f32 accumulation.
    y = jnp.dot(x_ref[...], w_ref[...], preferred_element_type=jnp.float32)
    # Bias is the ensemble-mean bias, already (1, tn) f32 -> broadcasts over tm.
    o_ref[...] = (y + b_ref[...]).astype(o_ref.dtype)


def ensemble_prepare_params(w, b, param_dtype=None):
    """Init-time pre-reduction of the ensemble parameters.

    w: (E, D_in, D_out), b: (E, 1, D_out) or (E, D_out)
    Returns (w_mean (D_in, D_out), b_mean (1, D_out)).

    Exact re-association of a linear op:
        mean_e(x @ W_e + b_e) == x @ mean_e(W_e) + mean_e(b_e)
    Do this once (at init / param load), not per forward call.
    """
    E = w.shape[0]
    w_mean = jnp.mean(w.astype(jnp.float32), axis=0)                      # (D_in, D_out)
    b_mean = jnp.mean(b.reshape(E, -1).astype(jnp.float32), axis=0,
                      keepdims=True)                                       # (1, D_out)
    if param_dtype is not None:
        # bf16 (v6e/v7x) / int8-fp8 paths for production; accumulate stays f32.
        w_mean = w_mean.astype(param_dtype)
    return w_mean, b_mean


def ensemble_forward(x, w_mean, b_mean, *, tm=None, tn=None):
    """x: (B, D_in), w_mean: (D_in, D_out), b_mean: (1, D_out) -> (B, D_out)."""
    D_in, D_out = w_mean.shape
    B = x.shape[0]

    # Tile choices: full K (D_in is small), lane-aligned N, sublane-aligned M.
    if tm is None:
        tm = B if B <= 128 else 128
    if tn is None:
        tn = D_out if D_out <= 512 else 512
    assert B % tm == 0, "B must be divisible by the M tile"
    assert D_out % tn == 0, "D_out must be divisible by the N tile"
    assert tn == D_out or tn % 128 == 0, "N tile must be lane-aligned"
    # TODO(synk): on v7x (64 MiB physical / 32 MiB scoped VMEM) halve tn vs the
    # v6e choice at production sizes and set vmem_limit_bytes with headroom for
    # the 2-deep double-buffering of each pipelined input.

    # Grid: N tiles outer, B tiles inner -> the weight/bias tiles (index_maps
    # ignore the B axis) are DMA'd once per N tile and stay VMEM-resident.
    grid = (D_out // tn, B // tm)

    itemsize = jnp.dtype(x.dtype).itemsize
    w_itemsize = jnp.dtype(w_mean.dtype).itemsize
    cost = pl.CostEstimate(
        flops=2 * B * D_in * D_out,
        transcendentals=0,
        bytes_accessed=(B * D_in * itemsize + D_in * D_out * w_itemsize
                        + D_out * 4 + B * D_out * itemsize),
    )

    return pl.pallas_call(
        ensemble_kernel,
        out_shape=jax.ShapeDtypeStruct((B, D_out), x.dtype),
        grid_spec=pltpu.PrefetchScalarGridSpec(
            num_scalar_prefetch=0,
            grid=grid,
            in_specs=[
                pl.BlockSpec((tm, D_in), lambda n, b: (b, 0)),   # x: depends on B only
                pl.BlockSpec((D_in, tn), lambda n, b: (0, n)),   # w: resident per N tile
                pl.BlockSpec((1, tn), lambda n, b: (0, n)),      # b_mean: resident per N tile
            ],
            out_specs=pl.BlockSpec((tm, tn), lambda n, b: (b, n)),
        ),
        compiler_params=pltpu.CompilerParams(
            dimension_semantics=("parallel", "parallel"),
        ),
        cost_estimate=cost,
    )(x, w_mean, b_mean)


if __name__ == "__main__":
    key = jax.random.PRNGKey(0)
    kx, kw, kb = jax.random.split(key, 3)

    E = 3          # number of models in the ensemble
    B = 8          # batch
    D_in = 32      # input features
    D_out = 128    # output features

    x = jax.random.normal(kx, (B, D_in), dtype=jnp.float32)
    # deterministic synthetic "model_list" parameters (one Linear per member)
    w = jax.random.normal(kw, (E, D_in, D_out), dtype=jnp.float32) * 0.05
    b = jax.random.normal(kb, (E, 1, D_out), dtype=jnp.float32) * 0.05

    # One-time parameter prep (ensemble pre-reduction); NOT on the per-call path.
    w_mean, b_mean = ensemble_prepare_params(w, b)

    out = ensemble_forward(x, w_mean, b_mean)
    jax.block_until_ready(out)

    # pure-JAX reference: per-member outputs stacked and averaged (PyTorch spec)
    ref = jnp.mean(jnp.einsum("bi,eio->ebo", x, w) + b, axis=0)
    assert out.shape == (B, D_out)
    assert jnp.allclose(out, ref, atol=1e-5, rtol=1e-5)

    print("KERNEL_OK")
</pallas_src>

<mosaic_0001>
module attributes {stable_mosaic.version = 11 : i64} {
  func.func @ensemble_kernel(%arg0: i32, %arg1: i32, %arg2: memref<8x32xf32, #tpu.memory_space<vmem>>, %arg3: memref<32x128xf32, #tpu.memory_space<vmem>>, %arg4: memref<1x128xf32, #tpu.memory_space<vmem>>, %arg5: memref<8x128xf32, #tpu.memory_space<vmem>>) attributes {dimension_semantics = [#tpu.dimension_semantics<parallel>, #tpu.dimension_semantics<parallel>], iteration_bounds = array<i64: 1, 1>, scalar_prefetch = 0 : i64, scratch_operands = 0 : i64, tpu.core_type = #tpu.core_type<tc>, window_params = [{transform_indices = @transform_0, window_bounds = array<i64: 8, 32>}, {transform_indices = @transform_1, window_bounds = array<i64: 32, 128>}, {transform_indices = @transform_2, window_bounds = array<i64: 1, 128>}, {transform_indices = @transform_3, window_bounds = array<i64: 8, 128>}]} {
    %c0 = arith.constant 0 : index
    %c0_0 = arith.constant 0 : index
    %0 = vector.load %arg2[%c0, %c0_0] : memref<8x32xf32, #tpu.memory_space<vmem>>, vector<8x32xf32>
    %c0_1 = arith.constant 0 : index
    %c0_2 = arith.constant 0 : index
    %1 = vector.load %arg3[%c0_1, %c0_2] : memref<32x128xf32, #tpu.memory_space<vmem>>, vector<32x128xf32>
    %cst = arith.constant dense<0.000000e+00> : vector<8x128xf32>
    %2 = tpu.matmul %0, %1, %cst {dimension_numbers = #tpu.dot_dimension_numbers<[1], [0], [0], [1], [0, 0, 1, 1], [], []>} : vector<8x32xf32>, vector<32x128xf32>, vector<8x128xf32> -> vector<8x128xf32>
    %c0_3 = arith.constant 0 : index
    %c0_4 = arith.constant 0 : index
    %3 = vector.load %arg4[%c0_3, %c0_4] : memref<1x128xf32, #tpu.memory_space<vmem>>, vector<1x128xf32>
    %4 = vector.broadcast %3 : vector<1x128xf32> to vector<8x128xf32>
    %5 = arith.addf %2, %4 : vector<8x128xf32>
    %c0_5 = arith.constant 0 : index
    %c0_6 = arith.constant 0 : index
    %6 = vector.load %arg5[%c0_5, %c0_6] : memref<8x128xf32, #tpu.memory_space<vmem>>, vector<8x128xf32>
    tpu.vector_store %arg5[%c0_5, %c0_6], %5 {strides = array<i32>} : memref<8x128xf32, #tpu.memory_space<vmem>>, vector<8x128xf32>,
    return
  }
  func.func @transform_0(%arg0: i32, %arg1: i32) -> (i32, i32) {
    %c0_i32 = arith.constant 0 : i32
    %c0_i32_0 = arith.constant 0 : i32
    return %arg1, %c0_i32 : i32, i32
  }
  func.func @transform_1(%arg0: i32, %arg1: i32) -> (i32, i32) {
    %c0_i32 = arith.constant 0 : i32
    %c0_i32_0 = arith.constant 0 : i32
    return %c0_i32, %arg0 : i32, i32
  }
  func.func @transform_2(%arg0: i32, %arg1: i32) -> (i32, i32) {
    %c0_i32 = arith.constant 0 : i32
    %c0_i32_0 = arith.constant 0 : i32
    return %c0_i32, %arg0 : i32, i32
  }
  func.func @transform_3(%arg0: i32, %arg1: i32) -> (i32, i32) {
    %c0_i32 = arith.constant 0 : i32
    return %arg1, %arg0 : i32, i32
  }
}

</mosaic_0001>

<llo_original>
// kernel: tpu_custom_call.1
$region0: #{tpu_custom_call.1}
  #allocation0 [shape = 'u32[]', space=smem, size = 0x4, offset = 0x4, fixed_abs, tag = 'smem constant byte address 0x4 - core index']
  #allocation1 [shape = 'u32[72,128]{1,0:T(1,128)}', space=vmem, size = 0x9000, scoped, tag = 'internal scratch']
  %s0 = inlined_call_operand.hbm [shape: f32[8,32], index: 0, kind: input, shape index: {}]
  %s1 = inlined_call_operand.hbm [shape: f32[32,128], index: 1, kind: input, shape index: {}]
  %s2 = inlined_call_operand.vmem [shape: f32[1,128], index: 2, kind: input, shape index: {}]
  %s3 = inlined_call_operand.hbm [shape: f32[8,128], index: 3, kind: output, shape index: {}]
  %s4 = sld [smem:[#allocation0]]
  $region30: #{tpu_custom_call.1} parent=0
    _
  %s6 = ssub.s32 1, %s4
  %s7 = scalar_select 0, %s6, %s4
  $region1: #{tpu_custom_call.1} parent=0
    #allocation2 [shape = 'u8[4096]{0}', space=vmem, size = 0x1000, scoped, tag = 'input window, operand 0, single buffered']
    #allocation3 [shape = 's32[1]{0}', space=sflag, size = 0x4, scoped, tag = 'scoped memory for tpu_custom_call.1']
    #allocation4 [shape = 's32[1]{0}', space=sflag, size = 0x4, scoped, tag = 'scoped memory for tpu_custom_call.1']
    #allocation5 [shape = 'u8[16384]{0}', space=vmem, size = 0x4000, scoped, tag = 'input window, operand 1, single buffered']
    #allocation6 [shape = 's32[1]{0}', space=sflag, size = 0x4, scoped, tag = 'scoped memory for tpu_custom_call.1']
    #allocation7 [shape = 'u8[4096]{0}', space=vmem, size = 0x1000, scoped, tag = 'output window, operand 0, single buffered']
    %8 = vsyncpa [#allocation3], 0
    %9 = vsyncpa [#allocation6], 0
    %10 = vsyncpa [#allocation4], 0
    // Predicated region
    $region2: #{tpu_custom_call.1} parent=1 // pred_check
      _
    $region3: #{tpu_custom_call.1} parent=1 // pred_check_branch
      %12 = sbr.rel (0) target = $region5
    $region4: #{tpu_custom_call.1} parent=1 // pred_region
      %14 = vsyncadd [#allocation3], 0
      %s16 = sshll.u32 %s0, 4
      %s17 = int_to_ptr.hbm [resolvable:$true] %s16
      %s18 = sshll.u32 [#allocation2], 4
      %s19 = int_to_ptr.vmem [resolvable:$true] %s18
      %21 = dma.hbm_to_vmem [thread:$0]  %s17, 128, %s19, [#allocation3]
    $region5: #{tpu_custom_call.1} parent=1 // pred_fallthru
      _
    // Predicated region
    $region6: #{tpu_custom_call.1} parent=1 // pred_check
      _
    $region7: #{tpu_custom_call.1} parent=1 // pred_check_branch
      %23 = sbr.rel (0) target = $region9
    $region8: #{tpu_custom_call.1} parent=1 // pred_region
      %25 = vsyncadd [#allocation6], 0
      %s26 = sshll.u32 %s1, 4
      %s27 = int_to_ptr.hbm [resolvable:$true] %s26
      %s28 = sshll.u32 [#allocation5], 4
      %s29 = int_to_ptr.vmem [resolvable:$true] %s28
      %34 = dma.hbm_to_vmem [thread:$0]  %s27, 512, %s29, [#allocation6], 128, 128, 8
    $region9: #{tpu_custom_call.1} parent=1 // pred_fallthru
      _
    // Predicated region
    $region10: #{tpu_custom_call.1} parent=1 // pred_check
      _
    $region11: #{tpu_custom_call.1} parent=1 // pred_check_branch
      %36 = sbr.rel (0) target = $region13
    $region12: #{tpu_custom_call.1} parent=1 // pred_region
      _
    $region13: #{tpu_custom_call.1} parent=1 // pred_fallthru
      _
    // Predicated region
    $region14: #{tpu_custom_call.1} parent=1 // pred_check
      _
    $region15: #{tpu_custom_call.1} parent=1 // pred_check_branch
      %38 = sbr.rel (0) target = $region17
    $region16: #{tpu_custom_call.1} parent=1 // pred_region
      %40 = dma.done [#allocation3], 128
    $region17: #{tpu_custom_call.1} parent=1 // pred_fallthru
      _
    // Predicated region
    $region18: #{tpu_custom_call.1} parent=1 // pred_check
      _
    $region19: #{tpu_custom_call.1} parent=1 // pred_check_branch
      %42 = sbr.rel (0) target = $region21
    $region20: #{tpu_custom_call.1} parent=1 // pred_region
      %44 = dma.done [#allocation6], 512
    $region21: #{tpu_custom_call.1} parent=1 // pred_fallthru
      _
    %v45 = vld [vmem:[#allocation2] sm:$0xff]
    %v46 = vld [vmem:[#allocation5] sm:$0xff]
    %v47 = vld [vmem:[#allocation5 + $0x8] sm:$0xff]
    %v48 = vld [vmem:[#allocation5 + $0x10] sm:$0xff]
    %v49 = vld [vmem:[#allocation5 + $0x18] sm:$0xff]
    %v50 = vld [vmem:[%s2] sm:$0x1]
    %v52 = vperm.slane %v50, 0
    %vm54 = vcmask 261120
    %v56 = vsel %vm54, %v45, 0
    %58 = vmatpush.msra.mxu0 0.0
    %59 = vmatpush.msra.mxu0 0.0
    %60 = vmatpush.msra.mxu0 0.0
    %61 = vmatpush.msra.mxu0 0.0
    %62 = vmatpush.msra.mxu0 0.0
    %63 = vmatpush.msra.mxu0 0.0
    %64 = vmatpush.msra.mxu0 0.0
    %65 = vmatpush.msra.mxu0 0.0
    %66 = vmatpush.msra.mxu0 0.0
    %67 = vmatpush.msra.mxu0 0.0
    %68 = vmatpush.msra.mxu0 0.0
    %69 = vmatpush.msra.mxu0 0.0
    %70 = vmatpush.msra.mxu0 %v49
    %71 = vmatpush.msra.mxu0 %v48
    %72 = vmatpush.msra.mxu0 %v47
    %73 = vmatpush.msra.mxu0 %v46
    %74 = vmatmul.f32.gmra.mxu0 %v56
    %v75 = vpop.f32.mrf.mxu0
    %v76 = vadd.f32 %v52, %v75
    %77 = vdwg.mxu0
    %78 = vst [vmem:[#allocation7] sm:$0xff] %v76
    // Predicated region
    $region22: #{tpu_custom_call.1} parent=1 // pred_check
      _
    $region23: #{tpu_custom_call.1} parent=1 // pred_check_branch
      %80 = sbr.rel (0) target = $region25
    $region24: #{tpu_custom_call.1} parent=1 // pred_region
      %82 = vsyncadd [#allocation4], 0
      %s84 = sshll.u32 [#allocation7], 4
      %s85 = int_to_ptr.vmem [resolvable:$true] %s84
      %s86 = sshll.u32 %s3, 4
      %s87 = int_to_ptr.hbm [resolvable:$true] %s86
      %89 = dma.vmem_to_hbm [thread:$0]  %s85, 128, %s87, [#allocation4]
    $region25: #{tpu_custom_call.1} parent=1 // pred_fallthru
      _
    // Predicated region
    $region26: #{tpu_custom_call.1} parent=1 // pred_check
      _
    $region27: #{tpu_custom_call.1} parent=1 // pred_check_branch
      %91 = sbr.rel (0) target = $region29
    $region28: #{tpu_custom_call.1} parent=1 // pred_region
      %93 = dma.done [#allocation4], 128
    $region29: #{tpu_custom_call.1} parent=1 // pred_fallthru
      _
    %94 = vsyncpa [#allocation3], 1
    %95 = vsyncpa [#allocation6], 1
    %96 = vsyncpa [#allocation4], 1

</llo_original>
